<compile_context>
chip_gen: v6e
topology: v6e:2x2x1
jax: 0.10.0
libtpu: 0.0.40
codegen_flags: <defaults>
</compile_context>

<pallas_src>
import functools

import jax
import jax.numpy as jnp
import numpy as np
from jax.experimental import pallas as pl
from jax.experimental.pallas import tpu as pltpu


def _round_up(x, m):
    return ((x + m - 1) // m) * m


def _pick_tile(n, max_tile):
    """Largest tile <= max_tile that divides n and is a multiple of 128."""
    if n <= max_tile:
        return n
    t = (max_tile // 128) * 128
    while t >= 128:
        if n % t == 0:
            return t
        t -= 128
    # TODO(synk): N with no 128-multiple divisor <= max_tile falls back to a single
    # whole-N tile; add ragged-tile masking if such shapes matter (VMEM risk on v7x).
    return n


# ---------------------------------------------------------------------------
# Pass 1: fused k/v 1x1-conv projections (one stacked MXU matmul), bf16/f32.
#   output k is position-major (N, C8p)  -> no transposes in the pass-2 hot loop
#   output v is channel-major (Cv, N) with row 0 = all-ones (softmax denominator)
# ---------------------------------------------------------------------------
def _kv_proj_kernel(x_ref, w_ref, b_ref, k_ref, v_ref, *, c8p):
    x = x_ref[0].astype(jnp.bfloat16)                                   # (C, tn)
    y = jnp.dot(w_ref[...], x, preferred_element_type=jnp.float32) + b_ref[...]
    # rows [0:c8p] = k (channel-major); rows [c8p:] = [ones ; 0*7 ; Wv @ x + bv]
    k_ref[0] = y[:c8p, :].T.astype(k_ref.dtype)                         # (tn, C8p)
    v_ref[0] = y[c8p:, :].astype(v_ref.dtype)                           # (Cv, tn)


# ---------------------------------------------------------------------------
# Pass 2: fused q-projection + flash-attention + residual, channel-major output.
# ---------------------------------------------------------------------------
def _sa_flash_kernel(wq_ref, bq_ref, k_ref, v_ref, x_ref, gamma_ref, o_ref,
                     q_sc, m_sc, acc_sc, *, c):
    ki = pl.program_id(2)

    @pl.when(ki == 0)
    def _():
        # q projection recomputed from the resident x tile (MXU slack) -> no q HBM
        # round-trip between the two passes.
        x_bf = x_ref[0].astype(jnp.bfloat16)                            # (C, tq)
        q = jnp.dot(wq_ref[...], x_bf,
                    preferred_element_type=jnp.float32) + bq_ref[...]
        q_sc[...] = q.astype(q_sc.dtype)                                # (C8p, tq) bf16
        m_sc[...] = jnp.full_like(m_sc, -jnp.inf)
        acc_sc[...] = jnp.zeros_like(acc_sc)

    k = k_ref[0]                                  # (tk, C8p) bf16, position-major
    v = v_ref[0]                                  # (Cv, tk)  bf16, row 0 = ones
    q = q_sc[...]                                 # (C8p, tq) bf16, channel-major

    # s[j, i] = energy[i, j] for this (q-tile, k-tile) pair; f32 MXU accumulate.
    s = jnp.dot(k, q, preferred_element_type=jnp.float32)               # (tk, tq)

    m_prev = m_sc[...]                                                  # (1, tq)
    m_new = jnp.maximum(m_prev, jnp.max(s, axis=0, keepdims=True))      # (1, tq)
    alpha = jnp.exp(m_prev - m_new)                                     # (1, tq) f32
    # bf16 exp on the EUP; p feeds the MXU directly (no separate f32->bf16 cast).
    p = jnp.exp((s - m_new).astype(jnp.bfloat16))                       # (tk, tq) bf16

    # Single PV matmul produces the output accumulator (rows 8:) AND the softmax
    # denominator (row 0, via the ones-row baked into v); f32 MXU accumulation.
    acc_sc[...] = alpha * acc_sc[...] + jnp.dot(
        v, p, preferred_element_type=jnp.float32)                       # (Cv, tq)
    m_sc[...] = m_new

    @pl.when(ki == pl.num_programs(2) - 1)
    def _():
        gamma = gamma_ref[0, 0]                                         # SMEM scalar
        inv_l = pl.reciprocal(acc_sc[0:1, :], approx=False)             # (1, tq)
        x_res = x_ref[0].astype(jnp.float32)                            # (C, tq)
        o_ref[0] = (gamma * (acc_sc[8:8 + c, :] * inv_l) + x_res).astype(o_ref.dtype)


# ---------------------------------------------------------------------------
# Wrapper
# ---------------------------------------------------------------------------
def sa_block(x_nchw, wq, bq, wk, bk, wv, bv, gamma, *,
             q_tile=1024, k_tile=512, proj_tile=512):
    """x_nchw: (B, C, H, W). wq/wk: (C, C//8), wv: (C, C)  (layout = (in, out));
    bq/bk: (1, C//8), bv: (1, C); gamma: (1, 1)."""
    B, C, H, W = x_nchw.shape
    N = H * W
    C8 = wq.shape[1]
    C8p = max(16, _round_up(C8, 16))   # bf16 sublane multiple only (no 128 pad)
    Cv = C + 8                         # v gets 8 extra rows; row 0 is all-ones

    x_bcn = x_nchw.reshape(B, C, N)    # free: keeps NCHW memory layout

    f32, bf16 = jnp.float32, jnp.bfloat16

    # q projection params (consumed inside pass 2), channel-major (out, in), bf16.
    wq_p = jnp.zeros((C8p, C), f32).at[:C8, :].set(wq.T).astype(bf16)
    bq_p = jnp.zeros((C8p, 1), f32).at[:C8, 0].set(bq.reshape(-1))

    # Fused k/v weights: rows = [Wk ; ones-bias row ; 0*7 ; Wv], stacked bias.
    w_kv = jnp.zeros((C8p + Cv, C), f32)
    w_kv = w_kv.at[:C8, :].set(wk.T)
    w_kv = w_kv.at[C8p + 8:C8p + 8 + C, :].set(wv.T)
    w_kv = w_kv.astype(bf16)
    b_kv = jnp.zeros((C8p + Cv, 1), f32)
    b_kv = b_kv.at[:C8, 0].set(bk.reshape(-1))
    b_kv = b_kv.at[C8p, 0].set(1.0)                 # ones row -> p column sums
    b_kv = b_kv.at[C8p + 8:C8p + 8 + C, 0].set(bv.reshape(-1))

    tn = _pick_tile(N, proj_tile)
    tq = _pick_tile(N, q_tile)
    tk = _pick_tile(N, k_tile)

    vmem_limit = 32 * 1024 * 1024      # safe on v7x (64 MiB physical), ample headroom

    # ---- pass 1: k (position-major) + ones-augmented v (channel-major) ----
    k_pm, v_cm = pl.pallas_call(
        functools.partial(_kv_proj_kernel, c8p=C8p),
        out_shape=(
            jax.ShapeDtypeStruct((B, N, C8p), bf16),   # k, position-major
            jax.ShapeDtypeStruct((B, Cv, N), bf16),    # v (+ ones row), channel-major
        ),
        grid_spec=pltpu.PrefetchScalarGridSpec(
            num_scalar_prefetch=0,
            grid=(B, N // tn),
            in_specs=[
                pl.BlockSpec((1, C, tn), lambda b, i: (b, 0, i)),        # x
                pl.BlockSpec((C8p + Cv, C), lambda b, i: (0, 0)),        # [Wk;.;Wv]
                pl.BlockSpec((C8p + Cv, 1), lambda b, i: (0, 0)),        # stacked bias
            ],
            out_specs=(
                pl.BlockSpec((1, tn, C8p), lambda b, i: (b, i, 0)),
                pl.BlockSpec((1, Cv, tn), lambda b, i: (b, 0, i)),
            ),
        ),
        compiler_params=pltpu.CompilerParams(
            dimension_semantics=("parallel", "parallel"),
            vmem_limit_bytes=vmem_limit),
    )(x_bcn, w_kv, b_kv)

    # ---- pass 2: fused q projection + flash attention + residual ----
    out_bcn = pl.pallas_call(
        functools.partial(_sa_flash_kernel, c=C),
        out_shape=jax.ShapeDtypeStruct((B, C, N), x_bcn.dtype),
        grid_spec=pltpu.PrefetchScalarGridSpec(
            num_scalar_prefetch=0,
            grid=(B, N // tq, N // tk),
            in_specs=[
                pl.BlockSpec((C8p, C), lambda b, qi, ki: (0, 0)),         # Wq
                pl.BlockSpec((C8p, 1), lambda b, qi, ki: (0, 0)),         # bq
                pl.BlockSpec((1, tk, C8p), lambda b, qi, ki: (b, ki, 0)), # k
                pl.BlockSpec((1, Cv, tk), lambda b, qi, ki: (b, 0, ki)),  # v
                pl.BlockSpec((1, C, tq), lambda b, qi, ki: (b, 0, qi)),   # x (res + q)
                pl.BlockSpec(memory_space=pltpu.MemorySpace.SMEM),        # gamma
            ],
            out_specs=pl.BlockSpec((1, C, tq), lambda b, qi, ki: (b, 0, qi)),
            scratch_shapes=[
                pltpu.VMEM((C8p, tq), bf16),          # q tile (computed at ki==0)
                pltpu.VMEM((1, tq), jnp.float32),     # running max
                pltpu.VMEM((Cv, tq), jnp.float32),    # accumulator (row 0 = denom)
            ],
        ),
        compiler_params=pltpu.CompilerParams(
            dimension_semantics=("parallel", "parallel", "arbitrary"),
            vmem_limit_bytes=vmem_limit),
    )(wq_p, bq_p, k_pm, v_cm, x_bcn, gamma.reshape(1, 1).astype(f32))

    return out_bcn.reshape(B, C, H, W)


# ---------------------------------------------------------------------------
# Plain-JAX reference mirroring the PyTorch forward (f32 throughout).
# ---------------------------------------------------------------------------
def sa_block_reference(x_nchw, wq, bq, wk, bk, wv, bv, gamma):
    B, C, H, W = x_nchw.shape
    N = H * W
    xf = x_nchw.reshape(B, C, N).astype(jnp.float32)                  # (B, C, N)
    q = jnp.einsum('bcn,ck->bkn', xf, wq) + bq.reshape(1, -1, 1)      # (B, C8, N)
    k = jnp.einsum('bcn,ck->bkn', xf, wk) + bk.reshape(1, -1, 1)
    v = jnp.einsum('bcn,ck->bkn', xf, wv) + bv.reshape(1, -1, 1)      # (B, C, N)
    energy = jnp.einsum('bkn,bkm->bnm', q, k)                         # (B, N, N)
    attn = jax.nn.softmax(energy, axis=-1)
    out = jnp.einsum('bcn,bmn->bcm', v, attn)                         # (B, C, N)
    out = out.reshape(B, C, H, W)
    return gamma.reshape(()) * out + xf.reshape(B, C, H, W)


if __name__ == "__main__":
    # Small shapes consistent with the module (in_dim must be >= 8 for C//8).
    B, C, H, W = 2, 32, 8, 8
    C8 = C // 8

    key = jax.random.PRNGKey(0)
    kx, kq, kk, kv, kbq, kbk, kbv = jax.random.split(key, 7)

    x = jax.random.normal(kx, (B, C, H, W), dtype=jnp.float32)

    # Synthetic params; 1x1-conv weights (out, in, 1, 1) stored here as (in, out).
    wq = jax.random.normal(kq, (C, C8), dtype=jnp.float32) * 0.1
    wk = jax.random.normal(kk, (C, C8), dtype=jnp.float32) * 0.1
    wv = jax.random.normal(kv, (C, C), dtype=jnp.float32) * 0.1
    bq = jax.random.normal(kbq, (1, C8), dtype=jnp.float32) * 0.05
    bk = jax.random.normal(kbk, (1, C8), dtype=jnp.float32) * 0.05
    bv = jax.random.normal(kbv, (1, C), dtype=jnp.float32) * 0.05
    gamma = jnp.ones((1, 1), dtype=jnp.float32)   # torch.ones(1)

    out = sa_block(x, wq, bq, wk, bk, wv, bv, gamma)
    out = jax.block_until_ready(out)

    ref = sa_block_reference(x, wq, bq, wk, bk, wv, bv, gamma)
    # bf16 MXU operands / bf16 exp (f32 accumulation + f32 softmax stats) vs f32 ref.
    np.testing.assert_allclose(np.asarray(out), np.asarray(ref),
                               rtol=5e-2, atol=5e-2)

    print("KERNEL_OK")
</pallas_src>

<mosaic_0001>
module attributes {stable_mosaic.version = 11 : i64} {
  func.func @_kv_proj_kernel(%arg0: i32, %arg1: i32, %arg2: memref<1x32x64xf32, #tpu.memory_space<vmem>>, %arg3: memref<56x32xbf16, #tpu.memory_space<vmem>>, %arg4: memref<56x1xf32, #tpu.memory_space<vmem>>, %arg5: memref<1x64x16xbf16, #tpu.memory_space<vmem>>, %arg6: memref<1x40x64xbf16, #tpu.memory_space<vmem>>) attributes {dimension_semantics = [#tpu.dimension_semantics<parallel>, #tpu.dimension_semantics<parallel>], iteration_bounds = array<i64: 2, 1>, scalar_prefetch = 0 : i64, scratch_operands = 0 : i64, tpu.core_type = #tpu.core_type<tc>, window_params = [{transform_indices = @transform_0, window_bounds = array<i64: 1, 32, 64>}, {pipeline_mode = #tpu.pipeline_mode<synchronous>, transform_indices = @transform_1, window_bounds = array<i64: 56, 32>}, {pipeline_mode = #tpu.pipeline_mode<synchronous>, transform_indices = @transform_2, window_bounds = array<i64: 56, 1>}, {transform_indices = @transform_3, window_bounds = array<i64: 1, 64, 16>}, {transform_indices = @transform_4, window_bounds = array<i64: 1, 40, 64>}]} {
    %c0 = arith.constant 0 : index
    %c0_0 = arith.constant 0 : index
    %c0_1 = arith.constant 0 : index
    %0 = vector.load %arg2[%c0, %c0_0, %c0_1] : memref<1x32x64xf32, #tpu.memory_space<vmem>>, vector<1x32x64xf32>
    %1 = vector.shape_cast %0 : vector<1x32x64xf32> to vector<32x64xf32>
    %2 = arith.truncf %1 : vector<32x64xf32> to vector<32x64xbf16>
    %c0_2 = arith.constant 0 : index
    %c0_3 = arith.constant 0 : index
    %3 = vector.load %arg3[%c0_2, %c0_3] : memref<56x32xbf16, #tpu.memory_space<vmem>>, vector<56x32xbf16>
    %cst = arith.constant dense<0.000000e+00> : vector<56x64xf32>
    %4 = tpu.matmul %3, %2, %cst {dimension_numbers = #tpu.dot_dimension_numbers<[1], [0], [0], [1], [0, 0, 1, 1], [], []>} : vector<56x32xbf16>, vector<32x64xbf16>, vector<56x64xf32> -> vector<56x64xf32>
    %c0_4 = arith.constant 0 : index
    %c0_5 = arith.constant 0 : index
    %5 = vector.load %arg4[%c0_4, %c0_5] : memref<56x1xf32, #tpu.memory_space<vmem>>, vector<56x1xf32>
    %6 = vector.broadcast %5 : vector<56x1xf32> to vector<56x64xf32>
    %7 = arith.addf %4, %6 : vector<56x64xf32>
    %8 = vector.extract_strided_slice %7 {offsets = [0, 0], sizes = [16, 64], strides = [1, 1]} : vector<56x64xf32> to vector<16x64xf32>
    %9 = tpu.transpose %8, [1, 0] : vector<16x64xf32> -> vector<64x16xf32>
    %10 = arith.truncf %9 : vector<64x16xf32> to vector<64x16xbf16>
    %c0_6 = arith.constant 0 : index
    %c0_7 = arith.constant 0 : index
    %c0_8 = arith.constant 0 : index
    %11 = vector.load %arg5[%c0_6, %c0_7, %c0_8] : memref<1x64x16xbf16, #tpu.memory_space<vmem>>, vector<1x64x16xbf16>
    %12 = vector.shape_cast %11 : vector<1x64x16xbf16> to vector<64x16xbf16>
    %13 = vector.shape_cast %10 : vector<64x16xbf16> to vector<1x64x16xbf16>
    tpu.vector_store %arg5[%c0_6, %c0_7, %c0_8], %13 {strides = array<i32>} : memref<1x64x16xbf16, #tpu.memory_space<vmem>>, vector<1x64x16xbf16>,
    %14 = vector.extract_strided_slice %7 {offsets = [16, 0], sizes = [40, 64], strides = [1, 1]} : vector<56x64xf32> to vector<40x64xf32>
    %15 = arith.truncf %14 : vector<40x64xf32> to vector<40x64xbf16>
    %c0_9 = arith.constant 0 : index
    %c0_10 = arith.constant 0 : index
    %c0_11 = arith.constant 0 : index
    %16 = vector.load %arg6[%c0_9, %c0_10, %c0_11] : memref<1x40x64xbf16, #tpu.memory_space<vmem>>, vector<1x40x64xbf16>
    %17 = vector.shape_cast %16 : vector<1x40x64xbf16> to vector<40x64xbf16>
    %18 = vector.shape_cast %15 : vector<40x64xbf16> to vector<1x40x64xbf16>
    tpu.vector_store %arg6[%c0_9, %c0_10, %c0_11], %18 {strides = array<i32>} : memref<1x40x64xbf16, #tpu.memory_space<vmem>>, vector<1x40x64xbf16>,
    return
  }
  func.func @transform_0(%arg0: i32, %arg1: i32) -> (i32, i32, i32) {
    %c0_i32 = arith.constant 0 : i32
    %c0_i32_0 = arith.constant 0 : i32
    return %arg0, %c0_i32, %arg1 : i32, i32, i32
  }
  func.func @transform_1(%arg0: i32, %arg1: i32) -> (i32, i32) {
    %c0_i32 = arith.constant 0 : i32
    %c0_i32_0 = arith.constant 0 : i32
    %c0_i32_1 = arith.constant 0 : i32
    return %c0_i32, %c0_i32_0 : i32, i32
  }
  func.func @transform_2(%arg0: i32, %arg1: i32) -> (i32, i32) {
    %c0_i32 = arith.constant 0 : i32
    %c0_i32_0 = arith.constant 0 : i32
    %c0_i32_1 = arith.constant 0 : i32
    return %c0_i32, %c0_i32_0 : i32, i32
  }
  func.func @transform_3(%arg0: i32, %arg1: i32) -> (i32, i32, i32) {
    %c0_i32 = arith.constant 0 : i32
    %c0_i32_0 = arith.constant 0 : i32
    return %arg0, %arg1, %c0_i32 : i32, i32, i32
  }
  func.func @transform_4(%arg0: i32, %arg1: i32) -> (i32, i32, i32) {
    %c0_i32 = arith.constant 0 : i32
    %c0_i32_0 = arith.constant 0 : i32
    return %arg0, %c0_i32, %arg1 : i32, i32, i32
  }
}

</mosaic_0001>

<llo_original>
// kernel: tpu_custom_call.1
$region0: #{tpu_custom_call.1}
  #allocation0 [shape = 'u32[]', space=smem, size = 0x4, offset = 0x4, fixed_abs, tag = 'smem constant byte address 0x4 - core index']
  #allocation1 [shape = 'u32[144,128]{1,0:T(1,128)}', space=vmem, size = 0x12000, scoped, tag = 'internal scratch']
  %s0 = inlined_call_operand.vmem [shape: f32[2,32,64], index: 0, kind: input, shape index: {}]
  %s1 = inlined_call_operand.vmem [shape: bf16[56,32], index: 1, kind: input, shape index: {}]
  %s2 = inlined_call_operand.vmem [shape: f32[56,1], index: 2, kind: input, shape index: {}]
  %s3 = inlined_call_operand.vmem [shape: bf16[2,64,16], index: 3, kind: output, shape index: {0}]
  %s4 = inlined_call_operand.hbm [shape: bf16[2,40,64], index: 4, kind: output, shape index: {1}]
  %5 = xla_tuple %s3, %s4
  %s6 = sld [smem:[#allocation0]]
  $region53: #{tpu_custom_call.1} parent=0
    _
  %s8 = ssub.s32 1, %s6
  %s9 = scalar_select 0, %s8, %s6
  $region1: #{tpu_custom_call.1} parent=0
    #allocation2 [shape = 'u8[20480]{0}', space=vmem, size = 0x5000, scoped, tag = 'output window, operand 1']
    #allocation3 [shape = 's32[2]{0}', space=sflag, size = 0x8, scoped, tag = 'scoped memory for tpu_custom_call.1']
    %10 = vsyncpa [#allocation3], 0
    %s11 = scalar_lea.sflag [#allocation3], 1
    %12 = vsyncpa %s11, 0
    loop: start=0, step=1, limit=4
    $region2: #{tpu_custom_call.1} parent=1 // loop_pre_header
      _
    $region3: #{tpu_custom_call.1} parent=1 // loop_header
      %s14 = sphi 0, %s18
      %p15 = scmp.ge.s32.totalorder %s14, 4
      %s21 = sphi 0, %s33
      %s22 = sphi 0, %s29
      %s23 = sphi 0, %s21
      %s24 = sphi 0, %s22
      %s25 = sphi 0, %s23
      %s26 = sphi 0, %s24
      %s38 = sphi 0, %s40
      %s41 = sphi 0, %s38
      %s42 = sphi 0, %s41
      %s58 = sphi 0, %s42
      %s62 = sphi 0, %s62
      %s64 = sphi 0, %s62
      %s65 = sphi 0, %s64
      %s79 = sphi 0, %s65
      %s83 = sphi 0, %s83
      %s85 = sphi 0, %s83
      %s86 = sphi 0, %s85
      %s100 = sphi 0, %s86
      %s108 = sphi 0, %s110
      %s111 = sphi 0, %s108
      %s112 = sphi 0, %s111
      %s128 = sphi 0, %s112
      %s136 = sphi 0, %s138
      %s139 = sphi 0, %s136
      %s140 = sphi 0, %s139
      %s156 = sphi 0, %s140
    $region4: #{tpu_custom_call.1} parent=1 // loop_header_branch
      %17 = sbr.rel (%p15) target = $region8
    $region5: #{tpu_custom_call.1} parent=1 // loop_body
      %s19 = ssub.s32 %s14, 1
      %s20 = ssub.s32 %s14, 2
      %s27 = sadd.s32 1, %s22
      %p28 = scmp.ge.s32.totalorder %s27, 1
      %s29 = scalar_select %p28, 0, %s27
      %s30 = sadd.s32 1, %s21
      %s31 = scalar_select %p28, %s30, %s21
      %p32 = scmp.ge.s32.totalorder %s31, 2
      %s33 = scalar_select %p32, 0, %s31
      %s34 = ssub.s32 %s21, %s33
      %s35 = ssub.s32 %s22, %s29
      %s36 = sor.u32 %s34, %s35
      %p37 = scmp.eq.s32.totalorder %s36, 0
      %s39 = sadd.s32 %s38, 1
      %s40 = scalar_select %p37, %s38, %s39
      %p43 = pneg %p37
      %p44 = scmp.eq.s32.totalorder %s14, 1
      %p45 = por %p43, %p44
      %p46 = scmp.ne.s32.totalorder %s38, %s41
      %p47 = scmp.eq.s32.totalorder %s14, 0
      %p48 = por %p46, %p47
      %p49 = scmp.ne.s32.totalorder %s38, %s41
      %p50 = scmp.eq.s32.totalorder %s19, 1
      %p51 = por %p49, %p50
      %p52 = scmp.ne.s32.totalorder %s41, %s42
      %p53 = scmp.eq.s32.totalorder %s19, 0
      %p54 = por %p52, %p53
      %p55 = scmp.ne.s32.totalorder %s41, %s42
      %p56 = scmp.eq.s32.totalorder %s20, 1
      %p57 = por %p55, %p56
      %p59 = scmp.ne.s32.totalorder %s42, %s58
      %p60 = scmp.eq.s32.totalorder %s20, 0
      %p61 = por %p59, %p60
      %s63 = sadd.s32 %s62, 1
      %p66 = scmp.eq.s32.totalorder %s14, 1
      %p67 = scmp.ne.s32.totalorder %s62, %s64
      %p68 = scmp.eq.s32.totalorder %s14, 0
      %p69 = por %p67, %p68
      %p70 = scmp.ne.s32.totalorder %s62, %s64
      %p71 = scmp.eq.s32.totalorder %s19, 1
      %p72 = por %p70, %p71
      %p73 = scmp.ne.s32.totalorder %s64, %s65
      %p74 = scmp.eq.s32.totalorder %s19, 0
      %p75 = por %p73, %p74
      %p76 = scmp.ne.s32.totalorder %s64, %s65
      %p77 = scmp.eq.s32.totalorder %s20, 1
      %p78 = por %p76, %p77
      %p80 = scmp.ne.s32.totalorder %s65, %s79
      %p81 = scmp.eq.s32.totalorder %s20, 0
      %p82 = por %p80, %p81
      %s84 = sadd.s32 %s83, 1
      %p87 = scmp.eq.s32.totalorder %s14, 1
      %p88 = scmp.ne.s32.totalorder %s83, %s85
      %p89 = scmp.eq.s32.totalorder %s14, 0
      %p90 = por %p88, %p89
      %p91 = scmp.ne.s32.totalorder %s83, %s85
      %p92 = scmp.eq.s32.totalorder %s19, 1
      %p93 = por %p91, %p92
      %p94 = scmp.ne.s32.totalorder %s85, %s86
      %p95 = scmp.eq.s32.totalorder %s19, 0
      %p96 = por %p94, %p95
      %p97 = scmp.ne.s32.totalorder %s85, %s86
      %p98 = scmp.eq.s32.totalorder %s20, 1
      %p99 = por %p97, %p98
      %p101 = scmp.ne.s32.totalorder %s86, %s100
      %p102 = scmp.eq.s32.totalorder %s20, 0
      %p103 = por %p101, %p102
      %s104 = ssub.s32 %s21, %s33
      %s105 = ssub.s32 %s22, %s29
      %s106 = sor.u32 %s104, %s105
      %p107 = scmp.eq.s32.totalorder %s106, 0
      %s109 = sadd.s32 %s108, 1
      %s110 = scalar_select %p107, %s108, %s109
      %p113 = pneg %p107
      %p114 = scmp.eq.s32.totalorder %s14, 1
      %p115 = por %p113, %p114
      %p116 = scmp.ne.s32.totalorder %s108, %s111
      %p117 = scmp.eq.s32.totalorder %s14, 0
      %p118 = por %p116, %p117
      %p119 = scmp.ne.s32.totalorder %s108, %s111
      %p120 = scmp.eq.s32.totalorder %s19, 1
      %p121 = por %p119, %p120
      %p122 = scmp.ne.s32.totalorder %s111, %s112
      %p123 = scmp.eq.s32.totalorder %s19, 0
      %p124 = por %p122, %p123
      %p125 = scmp.ne.s32.totalorder %s111, %s112
      %p126 = scmp.eq.s32.totalorder %s20, 1
      %p127 = por %p125, %p126
      %p129 = scmp.ne.s32.totalorder %s112, %s128
      %p130 = scmp.eq.s32.totalorder %s20, 0
      %p131 = por %p129, %p130
      %s132 = ssub.s32 %s21, %s33
      %s133 = ssub.s32 %s22, %s29
      %s134 = sor.u32 %s132, %s133
      %p135 = scmp.eq.s32.totalorder %s134, 0
      %s137 = sadd.s32 %s136, 1
      %s138 = scalar_select %p135, %s136, %s137
      %p141 = pneg %p135
      %p142 = scmp.eq.s32.totalorder %s14, 1
      %p143 = por %p141, %p142
      %p144 = scmp.ne.s32.totalorder %s136, %s139
      %p145 = scmp.eq.s32.totalorder %s14, 0
      %p146 = por %p144, %p145
      %p147 = scmp.ne.s32.totalorder %s136, %s139
      %p148 = scmp.eq.s32.totalorder %s19, 1
      %p149 = por %p147, %p148
      %p150 = scmp.ne.s32.totalorder %s139, %s140
      %p151 = scmp.eq.s32.totalorder %s19, 0
      %p152 = por %p150, %p151
      %p153 = scmp.ne.s32.totalorder %s139, %s140
      %p154 = scmp.eq.s32.totalorder %s20, 1
      %p155 = por %p153, %p154
      %p157 = scmp.ne.s32.totalorder %s140, %s156
      %p158 = scmp.eq.s32.totalorder %s20, 0
      %p159 = por %p157, %p158
      %p160 = scmp.le.s32.totalorder 1, %s14
      %p161 = scmp.lt.s32.totalorder %s14, 3
      %p162 = pnand %p160, %p161
      %p163 = pneg %p162
      // Predicated region
      $region9: #{tpu_custom_call.1} parent=5 // pred_check
        _
      $region10: #{tpu_custom_call.1} parent=5 // pred_check_branch
        %165 = sbr.rel (%p162) target = $region12
      $region11: #{tpu_custom_call.1} parent=5 // pred_region
        %s166 = ssub.s32 %s14, 1
        // Predicated region
        $region13: #{tpu_custom_call.1} parent=11 // pred_check
          %p167 = pneg %p75
        $region14: #{tpu_custom_call.1} parent=11 // pred_check_branch
          %169 = sbr.rel (%p167) target = $region16
        $region15: #{tpu_custom_call.1} parent=11 // pred_region
          _
        $region16: #{tpu_custom_call.1} parent=11 // pred_fallthru
          _
        // Predicated region
        $region17: #{tpu_custom_call.1} parent=11 // pred_check
          %p170 = pneg %p96
        $region18: #{tpu_custom_call.1} parent=11 // pred_check_branch
          %172 = sbr.rel (%p170) target = $region20
        $region19: #{tpu_custom_call.1} parent=11 // pred_region
          _
        $region20: #{tpu_custom_call.1} parent=11 // pred_fallthru
          _
      $region12: #{tpu_custom_call.1} parent=5 // pred_fallthru
        _
      %p173 = scmp.lt.s32.totalorder %s14, 2
      // Predicated region
      $region21: #{tpu_custom_call.1} parent=5 // pred_check
        %p174 = pneg %p173
      $region22: #{tpu_custom_call.1} parent=5 // pred_check_branch
        %176 = sbr.rel (%p174) target = $region24
      $region23: #{tpu_custom_call.1} parent=5 // pred_region
        // Predicated region
        $region25: #{tpu_custom_call.1} parent=23 // pred_check
          %p177 = pneg %p48
        $region26: #{tpu_custom_call.1} parent=23 // pred_check_branch
          %179 = sbr.rel (%p177) target = $region28
        $region27: #{tpu_custom_call.1} parent=23 // pred_region
          %p180 = scmp.lt.s32.totalorder %s21, 1
          %s181 = scalar_select %p180, %s21, 1
          %p182 = scmp.lt.s32.totalorder %s22, 0
          %s183 = scalar_select %p182, %s22, 0
          %s184 = smul.addr %s181, 4
          %s185 = sadd.s32 %s183, %s184
          %s186 = smul.addr %s185, 8
          %s187 = scalar_lea.vmem %s0, %s186
        $region28: #{tpu_custom_call.1} parent=23 // pred_fallthru
          _
      $region24: #{tpu_custom_call.1} parent=5 // pred_fallthru
        _
      %p188 = scmp.le.s32.totalorder 1, %s14
      %p189 = scmp.lt.s32.totalorder %s14, 3
      %p190 = pnand %p188, %p189
      %p191 = pneg %p190
      // Predicated region
      $region29: #{tpu_custom_call.1} parent=5 // pred_check
        _
      $region30: #{tpu_custom_call.1} parent=5 // pred_check_branch
        %193 = sbr.rel (%p190) target = $region32
      $region31: #{tpu_custom_call.1} parent=5 // pred_region
        %s194 = ssub.s32 %s14, 1
        %p195 = scmp.lt.s32.totalorder %s23, 1
        %s196 = scalar_select %p195, %s23, 1
        %p197 = scmp.lt.s32.totalorder %s24, 0
        %s198 = scalar_select %p197, %s24, 0
        %s199 = smul.addr %s196, 4
        %s200 = sadd.s32 %s198, %s199
        %s201 = smul.addr %s200, 8
        %s202 = scalar_lea.vmem %s0, %s201
        %p203 = pneg %p54
        %p204 = pneg %p51
        %p205 = pneg %p75
        %p206 = pneg %p72
        %p207 = pneg %p96
        %p208 = pneg %p93
        %p209 = pneg %p124
        %p210 = pneg %p121
        %s211 = smul.u32 8, %s24
        %p212 = scmp.lt.s32.totalorder %s23, 1
        %s213 = scalar_select %p212, %s23, 1
        %p214 = scmp.lt.s32.totalorder %s211, 7
        %s215 = scalar_select %p214, %s211, 7
        %s216 = smul.addr %s213, 8
        %s217 = sadd.s32 %s215, %s216
        %s218 = smul.addr %s217, 4
        %s219 = scalar_lea.vmem %s3, %s218
        %p220 = pneg %p152
        %p221 = pneg %p149
        %s222 = sand.u32 %s139, 1
        %s223 = scalar_lea.sflag [#allocation3], %s222
        %s224 = sand.u32 %s139, 1
        %s225 = smul.addr %s224, 20
        %s226 = scalar_lea.vmem [#allocation2], %s225
        %p227 = scmp.lt.s32.totalorder %s23, 1
        %s228 = scalar_select %p227, %s23, 1
        %p229 = scmp.lt.s32.totalorder %s24, 0
        %s230 = scalar_select %p229, %s24, 0
        %s231 = smul.addr %s228, 4
        %s232 = sadd.s32 %s230, %s231
        %s233 = smul.addr %s232, 8
        %s234 = scalar_lea.vmem %s0, %s233
        %s235 = smul.u32 8, %s24
        %p236 = scmp.lt.s32.totalorder %s23, 1
        %s237 = scalar_select %p236, %s23, 1
        %p238 = scmp.lt.s32.totalorder %s235, 7
        %s239 = scalar_select %p238, %s235, 7
        %s240 = smul.addr %s237, 8
        %s241 = sadd.s32 %s239, %s240
        %s242 = smul.addr %s241, 4
        %s243 = scalar_lea.vmem %s3, %s242
        %s244 = smul.u32 8, %s24
        %v246 = vld [vmem:[%s234] sm:$0xff]
        %v247 = vld [vmem:[%s234 + $0x8] sm:$0xff]
        %v248 = vld [vmem:[%s234 + $0x10] sm:$0xff]
        %v249 = vld [vmem:[%s234 + $0x18] sm:$0xff]
        %v250 = vpack.c.bf16 %v247, %v246
        %v251 = vpack.c.bf16 %v249, %v248
        %v252 = vld [vmem:[%s1] sm:$0xf]
        %v253 = vld [vmem:[%s1 + $0x4] sm:$0xf]
        %v254 = vld [vmem:[%s1 + $0x8] sm:$0xf]
        %v255 = vld [vmem:[%s1 + $0xc] sm:$0xf]
        %v256 = vld [vmem:[%s1 + $0x10] sm:$0xf]
        %v257 = vld [vmem:[%s1 + $0x14] sm:$0xf]
        %v258 = vld [vmem:[%s1 + $0x18] sm:$0xf]
        %v259 = vld [vmem:[%s2] sm:$0xff]
        %v260 = vld [vmem:[%s2 + $0x8] sm:$0xff]
        %v261 = vld [vmem:[%s2 + $0x10] sm:$0xff]
        %v262 = vld [vmem:[%s2 + $0x18] sm:$0xff]
        %v263 = vld [vmem:[%s2 + $0x20] sm:$0xff]
        %v264 = vld [vmem:[%s2 + $0x28] sm:$0xff]
        %v265 = vld [vmem:[%s2 + $0x30] sm:$0xff]
        %267 = vset.pattern.permute.xlu0 0
        %268 = vperm.xlu0 %267, %v259
        %v269 = vpop.permute.xlu0 %268
        %272 = vset.pattern.permute.xlu0 0
        %273 = vperm.xlu0 %272, %v260
        %v274 = vpop.permute.xlu0 %273
        %277 = vset.pattern.permute.xlu0 0
        %278 = vperm.xlu0 %277, %v261
        %v279 = vpop.permute.xlu0 %278
        %282 = vset.pattern.permute.xlu0 0
        %283 = vperm.xlu0 %282, %v262
        %v284 = vpop.permute.xlu0 %283
        %287 = vset.pattern.permute.xlu0 0
        %288 = vperm.xlu0 %287, %v263
        %v289 = vpop.permute.xlu0 %288
        %292 = vset.pattern.permute.xlu0 0
        %293 = vperm.xlu0 %292, %v264
        %v294 = vpop.permute.xlu0 %293
        %297 = vset.pattern.permute.xlu0 0
        %298 = vperm.xlu0 %297, %v265
        %v299 = vpop.permute.xlu0 %298
        %v308 = vunpack.c.l.b16 %v252
        %v309 = vunpack.c.l.b16 %v253
        %v310 = vunpack.c.l.b16 %v254
        %v311 = vunpack.c.l.b16 %v255
        %v312 = vunpack.c.l.b16 %v256
        %v313 = vunpack.c.l.b16 %v257
        %v314 = vunpack.c.l.b16 %v258
        %v315 = vpack.c.b16 %v309, %v308
        %v316 = vpack.c.b16 %v311, %v310
        %v317 = vpack.c.b16 %v313, %v312
        %v318 = vpack.c.b16 %v314, %v314
        %vm319 = vcmask 261120
        %v321 = vsel %vm319, %v315, 0
        %v324 = vsel %vm319, %v316, 0
        %v327 = vsel %vm319, %v317, 0
        %v330 = vsel %vm319, %v318, 0
        %332 = vmatprep.subr.bf16.mxu0 0
        %333 = vmatpush1.bf16.msra.mxu0 0
        %334 = vmatprep.subr.bf16.mxu0 0
        %335 = vmatpush1.bf16.msra.mxu0 0
        %336 = vmatprep.subr.bf16.mxu0 0
        %337 = vmatpush1.bf16.msra.mxu0 0
        %338 = vmatprep.subr.bf16.mxu0 0
        %339 = vmatpush1.bf16.msra.mxu0 0
        %340 = vmatprep.subr.bf16.mxu0 0
        %341 = vmatpush1.bf16.msra.mxu0 0
        %342 = vmatprep.subr.bf16.mxu0 0
        %343 = vmatpush1.bf16.msra.mxu0 0
        %344 = vmatprep.subr.bf16.mxu0 0
        %345 = vmatpush1.bf16.msra.mxu0 %v251
        %346 = vmatprep.subr.bf16.mxu0 0
        %347 = vmatpush1.bf16.msra.mxu0 %v250
        %348 = vmatprep.subr.bf16.mxu0 0
        %349 = vmatpush2.bf16.msra.mxu0 0
        %350 = vmatprep.subr.bf16.mxu0 0
        %351 = vmatpush2.bf16.msra.mxu0 0
        %352 = vmatprep.subr.bf16.mxu0 0
        %353 = vmatpush2.bf16.msra.mxu0 0
        %354 = vmatprep.subr.bf16.mxu0 0
        %355 = vmatpush2.bf16.msra.mxu0 0
        %356 = vmatprep.subr.bf16.mxu0 0
        %357 = vmatpush2.bf16.msra.mxu0 0
        %358 = vmatprep.subr.bf16.mxu0 0
        %359 = vmatpush2.bf16.msra.mxu0 0
        %360 = vmatprep.subr.bf16.mxu0 0
        %361 = vmatpush2.bf16.msra.mxu0 0
        %362 = vmatprep.subr.bf16.mxu0 0
        %363 = vmatpush2.bf16.msra.mxu0 0
        %364 = vmatprep.mubr.bf16.mxu0 0
        %365 = vmatmul.mubr.bf16.gmra.mxu0 %v321
        %v366 = vpop.f32.mrf.mxu0
        %v367 = vadd.f32 %v269, %v366
        %v368 = vpop.f32.mrf.mxu0
        %v369 = vpop.f32.mrf.mxu0
        %v370 = vadd.f32 %v274, %v369
        %v371 = vpop.f32.mrf.mxu0
        %372 = vmatprep.mubr.bf16.mxu0 0
        %373 = vmatmul.mubr.bf16.gmra.mxu0 %v324
        %v374 = vpop.f32.mrf.mxu0
        %v375 = vadd.f32 %v279, %v374
        %v376 = vpop.f32.mrf.mxu0
        %v377 = vpop.f32.mrf.mxu0
        %v378 = vadd.f32 %v284, %v377
        %v379 = vpop.f32.mrf.mxu0
        %380 = vmatprep.mubr.bf16.mxu0 0
        %381 = vmatmul.mubr.bf16.gmra.mxu0 %v327
        %v382 = vpop.f32.mrf.mxu0
        %v383 = vadd.f32 %v289, %v382
        %v384 = vpop.f32.mrf.mxu0
        %v385 = vpop.f32.mrf.mxu0
        %v386 = vadd.f32 %v294, %v385
        %v387 = vpop.f32.mrf.mxu0
        %388 = vmatprep.mubr.bf16.mxu0 0
        %389 = vmatmul.mubr.bf16.gmra.mxu0 %v330
        %v390 = vpop.f32.mrf.mxu0
        %v391 = vadd.f32 %v299, %v390
        %v392 = vpop.f32.mrf.mxu0
        %v393 = vpop.f32.mrf.mxu0
        %v394 = vpop.f32.mrf.mxu0
        %395 = vdwg.mxu0
        %396 = vxpose.xlu0.b32.start [1/16] %v367, 128
        %397 = vxpose.xlu0.b32.cont [2/16] %v370, 128
        %398 = vxpose.xlu0.b32.cont [3/16] 0.0, 128
        %399 = vxpose.xlu0.b32.cont [4/16] 0.0, 128
        %400 = vxpose.xlu0.b32.cont [5/16] 0.0, 128
        %401 = vxpose.xlu0.b32.cont [6/16] 0.0, 128
        %402 = vxpose.xlu0.b32.cont [7/16] 0.0, 128
        %403 = vxpose.xlu0.b32.cont [8/16] 0.0, 128
        %404 = vxpose.xlu0.b32.cont [9/16] 0.0, 128
        %405 = vxpose.xlu0.b32.cont [10/16] 0.0, 128
        %406 = vxpose.xlu0.b32.cont [11/16] 0.0, 128
        %407 = vxpose.xlu0.b32.cont [12/16] 0.0, 128
        %408 = vxpose.xlu0.b32.cont [13/16] 0.0, 128
        %409 = vxpose.xlu0.b32.cont [14/16] 0.0, 128
        %410 = vxpose.xlu0.b32.cont [15/16] 0.0, 128
        %411 = vxpose.xlu0.b32.end [16/16] 0.0, 128
        %v412 = vpop.trf.xlu0
        %v413 = vpop.trf.xlu0
        %v414 = vpop.trf.xlu0
        %v415 = vpop.trf.xlu0
        %v416 = vpop.trf.xlu0
        %v417 = vpop.trf.xlu0
        %v418 = vpop.trf.xlu0
        %v419 = vpop.trf.xlu0
        %v420 = vpop.trf.xlu0
        %v421 = vpop.trf.xlu0
        %v422 = vpop.trf.xlu0
        %v423 = vpop.trf.xlu0
        %v424 = vpop.trf.xlu0
        %v425 = vpop.trf.xlu0
        %v426 = vpop.trf.xlu0
        %v427 = vpop.trf.xlu0
        %v428 = vpack.c.bf16 %v413, %v412
        %v429 = vpack.c.bf16 %v415, %v414
        %v430 = vpack.c.bf16 %v417, %v416
        %v431 = vpack.c.bf16 %v419, %v418
        %v436 = vunpack.c.l.b16 %v428
        %v437 = vunpack.c.h.b16 %v428
        %v438 = vunpack.c.l.b16 %v429
        %v439 = vunpack.c.h.b16 %v429
        %v440 = vunpack.c.l.b16 %v430
        %v441 = vunpack.c.h.b16 %v430
        %v442 = vunpack.c.l.b16 %v431
        %v443 = vunpack.c.h.b16 %v431
        %v444 = vpack.c.b16 %v436, %v436
        %v445 = vpack.c.b16 %v437, %v437
        %v446 = vpack.c.b16 %v438, %v438
        %v447 = vpack.c.b16 %v439, %v439
        %v448 = vpack.c.b16 %v440, %v440
        %v449 = vpack.c.b16 %v441, %v441
        %v450 = vpack.c.b16 %v442, %v442
        %v451 = vpack.c.b16 %v443, %v443
        %vm460 = vcmask 125952
        %461 = vst.msk [vmem:[%s243] sm:$0xf] %vm460, %v444
        %462 = vst.msk [vmem:[%s243 + $0x4] sm:$0xf] %vm460, %v445
        %463 = vst.msk [vmem:[%s243 + $0x8] sm:$0xf] %vm460, %v446
        %464 = vst.msk [vmem:[%s243 + $0xc] sm:$0xf] %vm460, %v447
        %465 = vst.msk [vmem:[%s243 + $0x10] sm:$0xf] %vm460, %v448
        %466 = vst.msk [vmem:[%s243 + $0x14] sm:$0xf] %vm460, %v449
        %467 = vst.msk [vmem:[%s243 + $0x18] sm:$0xf] %vm460, %v450
        %468 = vst.msk [vmem:[%s243 + $0x1c] sm:$0xf] %vm460, %v451
        %v469 = vpack.c.bf16 %v378, %v375
        %v470 = vpack.c.bf16 %v386, %v383
        %v471 = vpack.c.bf16 %v391, %v391
        %v475 = vunpack.c.l.b16 %v469
        %v476 = vunpack.c.h.b16 %v469
        %v477 = vunpack.c.l.b16 %v470
        %v478 = vunpack.c.h.b16 %v470
        %v479 = vunpack.c.l.b16 %v471
        %v480 = vpack.c.b16 %v475, %v475
        %v481 = vpack.c.b16 %v476, %v476
        %v482 = vpack.c.b16 %v477, %v477
        %v483 = vpack.c.b16 %v478, %v478
        %v484 = vpack.c.b16 %v479, %v479
        %vm490 = vcmask 519168
        %491 = vst.msk [vmem:[%s226] sm:$0xf] %vm490, %v480
        %492 = vst.msk [vmem:[%s226 + $0x4] sm:$0xf] %vm490, %v481
        %493 = vst.msk [vmem:[%s226 + $0x8] sm:$0xf] %vm490, %v482
        %494 = vst.msk [vmem:[%s226 + $0xc] sm:$0xf] %vm490, %v483
        %495 = vst.msk [vmem:[%s226 + $0x10] sm:$0xf] %vm490, %v484
        %s496 = smul.u32 8, %s24
        %p497 = scmp.lt.s32.totalorder %s23, 1
        %s498 = scalar_select %p497, %s23, 1
        %p499 = scmp.lt.s32.totalorder %s496, 7
        %s500 = scalar_select %p499, %s496, 7
        %s501 = smul.addr %s498, 8
        %s502 = sadd.s32 %s500, %s501
        %s503 = smul.addr %s502, 4
        %s504 = scalar_lea.vmem %s3, %s503
        %s505 = sand.u32 %s139, 1
        %s506 = scalar_lea.sflag [#allocation3], %s505
        %s507 = sand.u32 %s139, 1
        %s508 = smul.addr %s507, 20
        %s509 = scalar_lea.vmem [#allocation2], %s508
        // Predicated region
        $region33: #{tpu_custom_call.1} parent=31 // pred_check
          %p510 = pneg %p121
        $region34: #{tpu_custom_call.1} parent=31 // pred_check_branch
          %512 = sbr.rel (%p510) target = $region36
        $region35: #{tpu_custom_call.1} parent=31 // pred_region
          %s513 = smul.u32 8, %s24
        $region36: #{tpu_custom_call.1} parent=31 // pred_fallthru
          _
        // Predicated region
        $region37: #{tpu_custom_call.1} parent=31 // pred_check
          %p514 = pneg %p149
        $region38: #{tpu_custom_call.1} parent=31 // pred_check_branch
          %516 = sbr.rel (%p514) target = $region40
        $region39: #{tpu_custom_call.1} parent=31 // pred_region
          %s518 = ssub.s32 320, 320
          %519 = vsyncadd %s506, %s518
          %s520 = smul.addr %s23, 5
          %s521 = sadd.s32 %s24, %s520
          %s522 = smul.addr %s521, 64
          %s523 = scalar_lea.hbm %s4, %s522
          %s524 = sshll.u32 %s509, 4
          %s525 = int_to_ptr.vmem [resolvable:$true] %s524
          %530 = dma.vmem_to_hbm [thread:$0]  %s525, 320, %s523, %s506, 64, 64, 4
        $region40: #{tpu_custom_call.1} parent=31 // pred_fallthru
          _
      $region32: #{tpu_custom_call.1} parent=5 // pred_fallthru
        _
      %p531 = scmp.le.s32.totalorder 2, %s14
      // Predicated region
      $region41: #{tpu_custom_call.1} parent=5 // pred_check
        %p532 = pneg %p531
      $region42: #{tpu_custom_call.1} parent=5 // pred_check_branch
        %534 = sbr.rel (%p532) target = $region44
      $region43: #{tpu_custom_call.1} parent=5 // pred_region
        %s535 = ssub.s32 %s14, 2
        // Predicated region
        $region45: #{tpu_custom_call.1} parent=43 // pred_check
          %p536 = pneg %p127
        $region46: #{tpu_custom_call.1} parent=43 // pred_check_branch
          %538 = sbr.rel (%p536) target = $region48
        $region47: #{tpu_custom_call.1} parent=43 // pred_region
          %s539 = smul.u32 8, %s26
          %p540 = scmp.lt.s32.totalorder %s25, 1
          %s541 = scalar_select %p540, %s25, 1
          %p542 = scmp.lt.s32.totalorder %s539, 7
          %s543 = scalar_select %p542, %s539, 7
          %s544 = smul.addr %s541, 8
          %s545 = sadd.s32 %s543, %s544
          %s546 = smul.addr %s545, 4
          %s547 = scalar_lea.vmem %s3, %s546
        $region48: #{tpu_custom_call.1} parent=43 // pred_fallthru
          _
        // Predicated region
        $region49: #{tpu_custom_call.1} parent=43 // pred_check
          %p548 = pneg %p155
        $region50: #{tpu_custom_call.1} parent=43 // pred_check_branch
          %550 = sbr.rel (%p548) target = $region52
        $region51: #{tpu_custom_call.1} parent=43 // pred_region
          %s551 = sand.u32 %s140, 1
          %s552 = scalar_lea.sflag [#allocation3], %s551
          %s553 = sand.u32 %s140, 1
          %s554 = smul.addr %s553, 20
          %s555 = scalar_lea.vmem [#allocation2], %s554
          %556 = dma.done %s552, 320
        $region52: #{tpu_custom_call.1} parent=43 // pred_fallthru
          _
      $region44: #{tpu_custom_call.1} parent=5 // pred_fallthru
        _
    $region6: #{tpu_custom_call.1} parent=1 // loop_footer
      %s18 = sadd.s32 1, %s14
    $region7: #{tpu_custom_call.1} parent=1 // loop_footer_branch
      %13 = sbr.rel target = $region3
    $region8: #{tpu_custom_call.1} parent=1 // loop_exit
      _
    %557 = vsyncpa [#allocation3], 1
    %s558 = scalar_lea.sflag [#allocation3], 1
    %559 = vsyncpa %s558, 1

</llo_original>
